<compile_context>
chip_gen: v5e
topology: v5e:2x2
jax: 0.10.0
libtpu: 0.0.40
codegen_flags: <defaults>
</compile_context>

<pallas_src>
import jax
import jax.numpy as jnp
from jax import lax
from jax.experimental import pallas as pl
from jax.experimental.pallas import tpu as pltpu


# ---------------- model dimensions (small, consistent with the forward) ------
B = 2                     # batch (images and texts -> logits are (B, B))
C, H, W = 4, 16, 16
D_IN = C * H * W          # 1024 flattened image features
SEQ = 8                   # text sequence length (power of 2 -> exact 1/SEQ fold)
VOCAB = 64                # token vocabulary
D = 32                    # shared embedding dim
EPS = 1e-12


# ---------------- Pallas kernel ----------------------------------------------
def clip_logits_kernel(texts_ref,     # SMEM (B, SEQ) int32   (scalar prefetch)
                       scale_ref,     # SMEM (1,)     f32     (scalar prefetch)
                       img_ref,       # VMEM (B, D_IN) bf16, flattened images
                       w_img_ref,     # VMEM (D_IN, D) bf16, image projection
                       tok_emb_ref,   # VMEM (VOCAB, D) f32, token-embedding table
                       w_txt_ref,     # VMEM (D, D) f32, text projection (pre-scaled by 1/SEQ)
                       out_ref):      # VMEM (B, B) f32, logits_per_image
    # --- image tower: bf16 linear projection, f32 accumulation (MXU) ---
    img_feat = jnp.dot(img_ref[...], w_img_ref[...],
                       preferred_element_type=jnp.float32)            # (B, D) f32

    # --- text tower: fused token-embedding gather + sum-pool (mean folded into w_txt) ---
    # Token ids live in SMEM; gather rows from the VMEM table with dynamic sublane
    # slices (B*SEQ = 16 tiny loads).
    rows = []
    for b in range(B):                                 # static Python loops (tiny trip count)
        acc = tok_emb_ref[pl.ds(texts_ref[b, 0], 1), :]                # (1, D)
        for s in range(1, SEQ):
            acc = acc + tok_emb_ref[pl.ds(texts_ref[b, s], 1), :]
        rows.append(acc)
    txt_pooled = jnp.concatenate(rows, axis=0)                         # (B, D)

    txt_feat = jnp.dot(txt_pooled, w_txt_ref[...],
                       preferred_element_type=jnp.float32)             # (B, D)

    # --- L2 normalize; fold the logit scale into the image-side rsqrt ---
    inv_img = lax.rsqrt(jnp.sum(img_feat * img_feat, axis=-1, keepdims=True) + EPS)
    inv_txt = lax.rsqrt(jnp.sum(txt_feat * txt_feat, axis=-1, keepdims=True) + EPS)
    img_n = img_feat * (inv_img * scale_ref[0])                        # (B, D), scale folded
    txt_n = txt_feat * inv_txt                                         # (B, D)

    # --- logits = scale * img_n @ txt_n.T, contracting last axes (no explicit transpose) ---
    out_ref[...] = lax.dot_general(
        img_n, txt_n,
        dimension_numbers=(((1,), (1,)), ((), ())),
        preferred_element_type=jnp.float32)                            # (B, B)


# ---------------- wrapper -----------------------------------------------------
def image_classification_forward(images_nchw, texts, params):
    """images_nchw: (B, C, H, W) f32; texts: (B, SEQ) int32 token ids."""
    # Glue: flatten NCHW image (metadata-only reshape) and cast the heavy operands to bf16.
    img_flat = images_nchw.reshape(B, D_IN).astype(jnp.bfloat16)       # (B, D_IN) bf16
    w_img = params["w_img"].astype(jnp.bfloat16)                       # (D_IN, D) bf16
    tok_emb = params["tok_emb"].astype(jnp.float32)                    # (VOCAB, D) f32
    w_txt = (params["w_txt"] * (1.0 / SEQ)).astype(jnp.float32)        # fold mean-pool (exact: SEQ=8)
    scale = params["logit_scale"].astype(jnp.float32)                  # (1,) f32

    # All operands (~80 KiB with bf16 w_img) fit VMEM trivially -> single grid step.
    # TODO(synk): if B grows (serving), add a "parallel" batch grid axis (shards across the
    # two v7x TensorCores) and pad the logits output to a lane-128-wide block.
    grid_spec = pltpu.PrefetchScalarGridSpec(
        num_scalar_prefetch=2,                  # texts + logit scale land in SMEM
        grid=(1,),
        in_specs=[
            pl.BlockSpec((B, D_IN), lambda i, t, s: (0, 0)),
            pl.BlockSpec((D_IN, D), lambda i, t, s: (0, 0)),
            pl.BlockSpec((VOCAB, D), lambda i, t, s: (0, 0)),
            pl.BlockSpec((D, D), lambda i, t, s: (0, 0)),
        ],
        out_specs=pl.BlockSpec((B, B), lambda i, t, s: (0, 0)),
    )

    return pl.pallas_call(
        clip_logits_kernel,
        out_shape=jax.ShapeDtypeStruct((B, B), jnp.float32),
        grid_spec=grid_spec,
        compiler_params=pltpu.CompilerParams(
            dimension_semantics=("arbitrary",)),
    )(texts.astype(jnp.int32), scale, img_flat, w_img, tok_emb, w_txt)


# ---------------- pure-JAX reference (silent sanity check) -------------------
def reference_forward(images_nchw, texts, params):
    # Apply the same bf16 quantization of the image tower operands as the kernel.
    img_flat = images_nchw.reshape(B, D_IN).astype(jnp.bfloat16).astype(jnp.float32)
    w_img = params["w_img"].astype(jnp.float32)
    img_feat = img_flat @ w_img
    txt_feat = jnp.mean(params["tok_emb"][texts], axis=1) @ params["w_txt"]
    img_n = img_feat / jnp.sqrt(jnp.sum(img_feat ** 2, -1, keepdims=True) + EPS)
    txt_n = txt_feat / jnp.sqrt(jnp.sum(txt_feat ** 2, -1, keepdims=True) + EPS)
    return params["logit_scale"][0] * (img_n @ txt_n.T)


if __name__ == "__main__":
    key = jax.random.PRNGKey(0)
    k_img, k_txt, k_wimg, k_wtxt, k_emb = jax.random.split(key, 5)

    # Deterministic synthetic parameters (no checkpoint loading).
    params = {
        # Image projection stored bf16 at the boundary (MXU-native, halves the dominant DMA).
        "w_img": (jax.random.normal(k_wimg, (D_IN, D), jnp.float32) * 0.02
                  ).astype(jnp.bfloat16),
        "w_txt": jax.random.normal(k_wtxt, (D, D), jnp.float32) * 0.02,
        "tok_emb": jax.random.normal(k_emb, (VOCAB, D), jnp.float32) * 0.02,
        # CLIP logit_scale = exp(log(1/0.07))
        "logit_scale": jnp.array([1.0 / 0.07], dtype=jnp.float32),
    }

    images = jax.random.normal(k_img, (B, C, H, W), jnp.float32)       # NCHW
    texts = jax.random.randint(k_txt, (B, SEQ), 0, VOCAB, jnp.int32)

    logits = image_classification_forward(images, texts, params)
    logits = jax.block_until_ready(logits)

    ref = reference_forward(images, texts, params)
    assert logits.shape == (B, B)
    assert jnp.allclose(logits, ref, atol=1e-3, rtol=1e-3)

    print("KERNEL_OK")
</pallas_src>

<mosaic_0001>
module attributes {stable_mosaic.version = 11 : i64} {
  func.func @clip_logits_kernel(%arg0: i32, %arg1: memref<2x8xi32, #tpu.memory_space<smem>>, %arg2: memref<1xf32, #tpu.memory_space<smem>>, %arg3: memref<2x1024xbf16, #tpu.memory_space<vmem>>, %arg4: memref<1024x32xbf16, #tpu.memory_space<vmem>>, %arg5: memref<64x32xf32, #tpu.memory_space<vmem>>, %arg6: memref<32x32xf32, #tpu.memory_space<vmem>>, %arg7: memref<2x2xf32, #tpu.memory_space<vmem>>) attributes {dimension_semantics = [#tpu.dimension_semantics<arbitrary>], iteration_bounds = array<i64: 1>, scalar_prefetch = 2 : i64, scratch_operands = 0 : i64, tpu.core_type = #tpu.core_type<tc>, window_params = [{pipeline_mode = #tpu.pipeline_mode<synchronous>, transform_indices = @transform_0, window_bounds = array<i64: 2, 1024>}, {pipeline_mode = #tpu.pipeline_mode<synchronous>, transform_indices = @transform_1, window_bounds = array<i64: 1024, 32>}, {pipeline_mode = #tpu.pipeline_mode<synchronous>, transform_indices = @transform_2, window_bounds = array<i64: 64, 32>}, {pipeline_mode = #tpu.pipeline_mode<synchronous>, transform_indices = @transform_3, window_bounds = array<i64: 32, 32>}, {pipeline_mode = #tpu.pipeline_mode<synchronous>, transform_indices = @transform_4, window_bounds = array<i64: 2, 2>}]} {
    %c0 = arith.constant 0 : index
    %c0_0 = arith.constant 0 : index
    %0 = vector.load %arg3[%c0, %c0_0] : memref<2x1024xbf16, #tpu.memory_space<vmem>>, vector<2x1024xbf16>
    %c0_1 = arith.constant 0 : index
    %c0_2 = arith.constant 0 : index
    %1 = vector.load %arg4[%c0_1, %c0_2] : memref<1024x32xbf16, #tpu.memory_space<vmem>>, vector<1024x32xbf16>
    %cst = arith.constant dense<0.000000e+00> : vector<2x32xf32>
    %2 = tpu.matmul %0, %1, %cst {dimension_numbers = #tpu.dot_dimension_numbers<[1], [0], [0], [1], [0, 0, 1, 1], [], []>} : vector<2x1024xbf16>, vector<1024x32xbf16>, vector<2x32xf32> -> vector<2x32xf32>
    %c0_3 = arith.constant 0 : index
    %c0_4 = arith.constant 0 : index
    %3 = memref.load %arg1[%c0_3, %c0_4] : memref<2x8xi32, #tpu.memory_space<smem>>
    %4 = arith.index_cast %3 : i32 to index
    %c0_5 = arith.constant 0 : index
    %5 = vector.load %arg5[%4, %c0_5] : memref<64x32xf32, #tpu.memory_space<vmem>>, vector<1x32xf32>
    %c0_6 = arith.constant 0 : index
    %c1 = arith.constant 1 : index
    %6 = memref.load %arg1[%c0_6, %c1] : memref<2x8xi32, #tpu.memory_space<smem>>
    %7 = arith.index_cast %6 : i32 to index
    %c0_7 = arith.constant 0 : index
    %8 = vector.load %arg5[%7, %c0_7] : memref<64x32xf32, #tpu.memory_space<vmem>>, vector<1x32xf32>
    %9 = arith.addf %5, %8 : vector<1x32xf32>
    %c0_8 = arith.constant 0 : index
    %c2 = arith.constant 2 : index
    %10 = memref.load %arg1[%c0_8, %c2] : memref<2x8xi32, #tpu.memory_space<smem>>
    %11 = arith.index_cast %10 : i32 to index
    %c0_9 = arith.constant 0 : index
    %12 = vector.load %arg5[%11, %c0_9] : memref<64x32xf32, #tpu.memory_space<vmem>>, vector<1x32xf32>
    %13 = arith.addf %9, %12 : vector<1x32xf32>
    %c0_10 = arith.constant 0 : index
    %c3 = arith.constant 3 : index
    %14 = memref.load %arg1[%c0_10, %c3] : memref<2x8xi32, #tpu.memory_space<smem>>
    %15 = arith.index_cast %14 : i32 to index
    %c0_11 = arith.constant 0 : index
    %16 = vector.load %arg5[%15, %c0_11] : memref<64x32xf32, #tpu.memory_space<vmem>>, vector<1x32xf32>
    %17 = arith.addf %13, %16 : vector<1x32xf32>
    %c0_12 = arith.constant 0 : index
    %c4 = arith.constant 4 : index
    %18 = memref.load %arg1[%c0_12, %c4] : memref<2x8xi32, #tpu.memory_space<smem>>
    %19 = arith.index_cast %18 : i32 to index
    %c0_13 = arith.constant 0 : index
    %20 = vector.load %arg5[%19, %c0_13] : memref<64x32xf32, #tpu.memory_space<vmem>>, vector<1x32xf32>
    %21 = arith.addf %17, %20 : vector<1x32xf32>
    %c0_14 = arith.constant 0 : index
    %c5 = arith.constant 5 : index
    %22 = memref.load %arg1[%c0_14, %c5] : memref<2x8xi32, #tpu.memory_space<smem>>
    %23 = arith.index_cast %22 : i32 to index
    %c0_15 = arith.constant 0 : index
    %24 = vector.load %arg5[%23, %c0_15] : memref<64x32xf32, #tpu.memory_space<vmem>>, vector<1x32xf32>
    %25 = arith.addf %21, %24 : vector<1x32xf32>
    %c0_16 = arith.constant 0 : index
    %c6 = arith.constant 6 : index
    %26 = memref.load %arg1[%c0_16, %c6] : memref<2x8xi32, #tpu.memory_space<smem>>
    %27 = arith.index_cast %26 : i32 to index
    %c0_17 = arith.constant 0 : index
    %28 = vector.load %arg5[%27, %c0_17] : memref<64x32xf32, #tpu.memory_space<vmem>>, vector<1x32xf32>
    %29 = arith.addf %25, %28 : vector<1x32xf32>
    %c0_18 = arith.constant 0 : index
    %c7 = arith.constant 7 : index
    %30 = memref.load %arg1[%c0_18, %c7] : memref<2x8xi32, #tpu.memory_space<smem>>
    %31 = arith.index_cast %30 : i32 to index
    %c0_19 = arith.constant 0 : index
    %32 = vector.load %arg5[%31, %c0_19] : memref<64x32xf32, #tpu.memory_space<vmem>>, vector<1x32xf32>
    %33 = arith.addf %29, %32 : vector<1x32xf32>
    %c1_20 = arith.constant 1 : index
    %c0_21 = arith.constant 0 : index
    %34 = memref.load %arg1[%c1_20, %c0_21] : memref<2x8xi32, #tpu.memory_space<smem>>
    %35 = arith.index_cast %34 : i32 to index
    %c0_22 = arith.constant 0 : index
    %36 = vector.load %arg5[%35, %c0_22] : memref<64x32xf32, #tpu.memory_space<vmem>>, vector<1x32xf32>
    %c1_23 = arith.constant 1 : index
    %c1_24 = arith.constant 1 : index
    %37 = memref.load %arg1[%c1_23, %c1_24] : memref<2x8xi32, #tpu.memory_space<smem>>
    %38 = arith.index_cast %37 : i32 to index
    %c0_25 = arith.constant 0 : index
    %39 = vector.load %arg5[%38, %c0_25] : memref<64x32xf32, #tpu.memory_space<vmem>>, vector<1x32xf32>
    %40 = arith.addf %36, %39 : vector<1x32xf32>
    %c1_26 = arith.constant 1 : index
    %c2_27 = arith.constant 2 : index
    %41 = memref.load %arg1[%c1_26, %c2_27] : memref<2x8xi32, #tpu.memory_space<smem>>
    %42 = arith.index_cast %41 : i32 to index
    %c0_28 = arith.constant 0 : index
    %43 = vector.load %arg5[%42, %c0_28] : memref<64x32xf32, #tpu.memory_space<vmem>>, vector<1x32xf32>
    %44 = arith.addf %40, %43 : vector<1x32xf32>
    %c1_29 = arith.constant 1 : index
    %c3_30 = arith.constant 3 : index
    %45 = memref.load %arg1[%c1_29, %c3_30] : memref<2x8xi32, #tpu.memory_space<smem>>
    %46 = arith.index_cast %45 : i32 to index
    %c0_31 = arith.constant 0 : index
    %47 = vector.load %arg5[%46, %c0_31] : memref<64x32xf32, #tpu.memory_space<vmem>>, vector<1x32xf32>
    %48 = arith.addf %44, %47 : vector<1x32xf32>
    %c1_32 = arith.constant 1 : index
    %c4_33 = arith.constant 4 : index
    %49 = memref.load %arg1[%c1_32, %c4_33] : memref<2x8xi32, #tpu.memory_space<smem>>
    %50 = arith.index_cast %49 : i32 to index
    %c0_34 = arith.constant 0 : index
    %51 = vector.load %arg5[%50, %c0_34] : memref<64x32xf32, #tpu.memory_space<vmem>>, vector<1x32xf32>
    %52 = arith.addf %48, %51 : vector<1x32xf32>
    %c1_35 = arith.constant 1 : index
    %c5_36 = arith.constant 5 : index
    %53 = memref.load %arg1[%c1_35, %c5_36] : memref<2x8xi32, #tpu.memory_space<smem>>
    %54 = arith.index_cast %53 : i32 to index
    %c0_37 = arith.constant 0 : index
    %55 = vector.load %arg5[%54, %c0_37] : memref<64x32xf32, #tpu.memory_space<vmem>>, vector<1x32xf32>
    %56 = arith.addf %52, %55 : vector<1x32xf32>
    %c1_38 = arith.constant 1 : index
    %c6_39 = arith.constant 6 : index
    %57 = memref.load %arg1[%c1_38, %c6_39] : memref<2x8xi32, #tpu.memory_space<smem>>
    %58 = arith.index_cast %57 : i32 to index
    %c0_40 = arith.constant 0 : index
    %59 = vector.load %arg5[%58, %c0_40] : memref<64x32xf32, #tpu.memory_space<vmem>>, vector<1x32xf32>
    %60 = arith.addf %56, %59 : vector<1x32xf32>
    %c1_41 = arith.constant 1 : index
    %c7_42 = arith.constant 7 : index
    %61 = memref.load %arg1[%c1_41, %c7_42] : memref<2x8xi32, #tpu.memory_space<smem>>
    %62 = arith.index_cast %61 : i32 to index
    %c0_43 = arith.constant 0 : index
    %63 = vector.load %arg5[%62, %c0_43] : memref<64x32xf32, #tpu.memory_space<vmem>>, vector<1x32xf32>
    %64 = arith.addf %60, %63 : vector<1x32xf32>
    %65 = tpu.concatenate %33, %64 in 0 : vector<1x32xf32>, vector<1x32xf32> -> vector<2x32xf32>
    %c0_44 = arith.constant 0 : index
    %c0_45 = arith.constant 0 : index
    %66 = vector.load %arg6[%c0_44, %c0_45] : memref<32x32xf32, #tpu.memory_space<vmem>>, vector<32x32xf32>
    %cst_46 = arith.constant dense<0.000000e+00> : vector<2x32xf32>
    %67 = tpu.matmul %65, %66, %cst_46 {dimension_numbers = #tpu.dot_dimension_numbers<[1], [0], [0], [1], [0, 0, 1, 1], [], []>} : vector<2x32xf32>, vector<32x32xf32>, vector<2x32xf32> -> vector<2x32xf32>
    %68 = arith.mulf %2, %2 : vector<2x32xf32>
    %cst_47 = arith.constant dense<0.000000e+00> : vector<2xf32>
    %69 = vector.multi_reduction <add>, %68, %cst_47 [1] : vector<2x32xf32> to vector<2xf32>
    %70 = vector.shape_cast %69 : vector<2xf32> to vector<2x1xf32>
    %cst_48 = arith.constant 9.99999996E-13 : f32
    %71 = vector.broadcast %cst_48 : f32 to vector<2x1xf32>
    %72 = arith.addf %70, %71 : vector<2x1xf32>
    %73 = math.rsqrt %72 : vector<2x1xf32>
    %74 = arith.mulf %67, %67 : vector<2x32xf32>
    %cst_49 = arith.constant dense<0.000000e+00> : vector<2xf32>
    %75 = vector.multi_reduction <add>, %74, %cst_49 [1] : vector<2x32xf32> to vector<2xf32>
    %76 = vector.shape_cast %75 : vector<2xf32> to vector<2x1xf32>
    %cst_50 = arith.constant 9.99999996E-13 : f32
    %77 = vector.broadcast %cst_50 : f32 to vector<2x1xf32>
    %78 = arith.addf %76, %77 : vector<2x1xf32>
    %79 = math.rsqrt %78 : vector<2x1xf32>
    %c0_51 = arith.constant 0 : index
    %80 = memref.load %arg2[%c0_51] : memref<1xf32, #tpu.memory_space<smem>>
    %81 = vector.broadcast %80 : f32 to vector<2x1xf32>
    %82 = arith.mulf %73, %81 : vector<2x1xf32>
    %83 = vector.broadcast %82 : vector<2x1xf32> to vector<2x32xf32>
    %84 = arith.mulf %2, %83 : vector<2x32xf32>
    %85 = vector.broadcast %79 : vector<2x1xf32> to vector<2x32xf32>
    %86 = arith.mulf %67, %85 : vector<2x32xf32>
    %cst_52 = arith.constant dense<0.000000e+00> : vector<2x2xf32>
    %87 = tpu.matmul %84, %86, %cst_52 {dimension_numbers = #tpu.dot_dimension_numbers<[1], [1], [0], [0], [0, 0, 1, 0], [], []>} : vector<2x32xf32>, vector<2x32xf32>, vector<2x2xf32> -> vector<2x2xf32>
    %c0_53 = arith.constant 0 : index
    %c0_54 = arith.constant 0 : index
    %88 = vector.load %arg7[%c0_53, %c0_54] : memref<2x2xf32, #tpu.memory_space<vmem>>, vector<2x2xf32>
    tpu.vector_store %arg7[%c0_53, %c0_54], %87 {strides = array<i32>} : memref<2x2xf32, #tpu.memory_space<vmem>>, vector<2x2xf32>,
    return
  }
  func.func @transform_0(%arg0: i32, %arg1: memref<2x8xi32, #tpu.memory_space<smem>>, %arg2: memref<1xf32, #tpu.memory_space<smem>>) -> (i32, i32) {
    %c0_i32 = arith.constant 0 : i32
    %c0_i32_0 = arith.constant 0 : i32
    %c0_i32_1 = arith.constant 0 : i32
    return %c0_i32, %c0_i32_0 : i32, i32
  }
  func.func @transform_1(%arg0: i32, %arg1: memref<2x8xi32, #tpu.memory_space<smem>>, %arg2: memref<1xf32, #tpu.memory_space<smem>>) -> (i32, i32) {
    %c0_i32 = arith.constant 0 : i32
    %c0_i32_0 = arith.constant 0 : i32
    %c0_i32_1 = arith.constant 0 : i32
    return %c0_i32, %c0_i32_0 : i32, i32
  }
  func.func @transform_2(%arg0: i32, %arg1: memref<2x8xi32, #tpu.memory_space<smem>>, %arg2: memref<1xf32, #tpu.memory_space<smem>>) -> (i32, i32) {
    %c0_i32 = arith.constant 0 : i32
    %c0_i32_0 = arith.constant 0 : i32
    %c0_i32_1 = arith.constant 0 : i32
    return %c0_i32, %c0_i32_0 : i32, i32
  }
  func.func @transform_3(%arg0: i32, %arg1: memref<2x8xi32, #tpu.memory_space<smem>>, %arg2: memref<1xf32, #tpu.memory_space<smem>>) -> (i32, i32) {
    %c0_i32 = arith.constant 0 : i32
    %c0_i32_0 = arith.constant 0 : i32
    %c0_i32_1 = arith.constant 0 : i32
    return %c0_i32, %c0_i32_0 : i32, i32
  }
  func.func @transform_4(%arg0: i32, %arg1: memref<2x8xi32, #tpu.memory_space<smem>>, %arg2: memref<1xf32, #tpu.memory_space<smem>>) -> (i32, i32) {
    %c0_i32 = arith.constant 0 : i32
    %c0_i32_0 = arith.constant 0 : i32
    %c0_i32_1 = arith.constant 0 : i32
    return %c0_i32, %c0_i32_0 : i32, i32
  }
}

</mosaic_0001>

<llo_original>
// kernel: tpu_custom_call.1
$region0: #{tpu_custom_call.1}
  #allocation0 [shape = 'u32[]', space=smem, size = 0x4, offset = 0x4, fixed_abs, tag = 'smem constant byte address 0x4 - core index']
  #allocation1 [shape = 'u32[72,128]{1,0:T(1,128)}', space=vmem, size = 0x9000, scoped, tag = 'internal scratch']
  #allocation2 [shape = 's32[1]{0}', space=sflag, size = 0x4, scoped, tag = 'scoped memory for tpu_custom_call.1']
  #allocation3 [shape = 'u8[1024]{0}', space=smem, size = 0x400, scoped, tag = 'prefetched SMEM operand 0']
  #allocation4 [shape = 'f32[1]{0:T(128)S(6)}', space=smem, size = 0x200, scoped, tag = 'prefetched SMEM operand 1']
  %s0 = inlined_call_operand.vmem [shape: s32[2,8], index: 0, kind: input, shape index: {}]
  %s1 = inlined_call_operand.<no memory space> [shape: f32[1], index: 1, kind: input, shape index: {}]
  %s2 = inlined_call_operand.vmem [shape: bf16[2,1024], index: 2, kind: input, shape index: {}]
  %s3 = inlined_call_operand.vmem [shape: bf16[1024,32], index: 3, kind: input, shape index: {}]
  %s4 = inlined_call_operand.vmem [shape: f32[64,32], index: 4, kind: input, shape index: {}]
  %s5 = inlined_call_operand.vmem [shape: f32[32,32], index: 5, kind: input, shape index: {}]
  %s6 = inlined_call_operand.hbm [shape: f32[2,2], index: 6, kind: output, shape index: {}]
  %s7 = sld [smem:[#allocation0]]
  $region26: #{tpu_custom_call.1} parent=0
    _
  %s9 = ssub.s32 1, %s7
  %s10 = scalar_select 0, %s9, %s7
  %s12 = sshll.u32 %s0, 4
  %s13 = int_to_ptr.vmem [resolvable:$true] %s12
  %15 = dma.vmem_to_smem %s13, 32, [#allocation3], [#allocation2]
  %16 = sst [smem:[#allocation4]] %s1
  %18 = dma.done [#allocation2], 32
  %19 = sfence
  $region1: #{tpu_custom_call.1} parent=0
    #allocation5 [shape = 'u8[1024]{0}', space=vmem, size = 0x400, scoped, tag = 'output window, operand 0, single buffered']
    #allocation6 [shape = 's32[1]{0}', space=sflag, size = 0x4, scoped, tag = 'scoped memory for tpu_custom_call.1']
    %20 = vsyncpa [#allocation6], 0
    // Predicated region
    $region2: #{tpu_custom_call.1} parent=1 // pred_check
      _
    $region3: #{tpu_custom_call.1} parent=1 // pred_check_branch
      %22 = sbr.rel (0) target = $region5
    $region4: #{tpu_custom_call.1} parent=1 // pred_region
      _
    $region5: #{tpu_custom_call.1} parent=1 // pred_fallthru
      _
    // Predicated region
    $region6: #{tpu_custom_call.1} parent=1 // pred_check
      _
    $region7: #{tpu_custom_call.1} parent=1 // pred_check_branch
      %24 = sbr.rel (0) target = $region9
    $region8: #{tpu_custom_call.1} parent=1 // pred_region
      _
    $region9: #{tpu_custom_call.1} parent=1 // pred_fallthru
      _
    // Predicated region
    $region10: #{tpu_custom_call.1} parent=1 // pred_check
      _
    $region11: #{tpu_custom_call.1} parent=1 // pred_check_branch
      %26 = sbr.rel (0) target = $region13
    $region12: #{tpu_custom_call.1} parent=1 // pred_region
      _
    $region13: #{tpu_custom_call.1} parent=1 // pred_fallthru
      _
    // Predicated region
    $region14: #{tpu_custom_call.1} parent=1 // pred_check
      _
    $region15: #{tpu_custom_call.1} parent=1 // pred_check_branch
      %28 = sbr.rel (0) target = $region17
    $region16: #{tpu_custom_call.1} parent=1 // pred_region
      _
    $region17: #{tpu_custom_call.1} parent=1 // pred_fallthru
      _
    %v29 = vld [vmem:[%s2] sm:$0xff]
    %v30 = vld [vmem:[%s3] sm:$0xf]
    %v31 = vld [vmem:[%s3 + $0x4] sm:$0xf]
    %v32 = vld [vmem:[%s3 + $0x8] sm:$0xf]
    %v33 = vld [vmem:[%s3 + $0xc] sm:$0xf]
    %v34 = vld [vmem:[%s3 + $0x10] sm:$0xf]
    %v35 = vld [vmem:[%s3 + $0x14] sm:$0xf]
    %v36 = vld [vmem:[%s3 + $0x18] sm:$0xf]
    %v37 = vld [vmem:[%s3 + $0x1c] sm:$0xf]
    %v38 = vld [vmem:[%s3 + $0x20] sm:$0xf]
    %v39 = vld [vmem:[%s3 + $0x24] sm:$0xf]
    %v40 = vld [vmem:[%s3 + $0x28] sm:$0xf]
    %v41 = vld [vmem:[%s3 + $0x2c] sm:$0xf]
    %v42 = vld [vmem:[%s3 + $0x30] sm:$0xf]
    %v43 = vld [vmem:[%s3 + $0x34] sm:$0xf]
    %v44 = vld [vmem:[%s3 + $0x38] sm:$0xf]
    %v45 = vld [vmem:[%s3 + $0x3c] sm:$0xf]
    %v46 = vld [vmem:[%s3 + $0x40] sm:$0xf]
    %v47 = vld [vmem:[%s3 + $0x44] sm:$0xf]
    %v48 = vld [vmem:[%s3 + $0x48] sm:$0xf]
    %v49 = vld [vmem:[%s3 + $0x4c] sm:$0xf]
    %v50 = vld [vmem:[%s3 + $0x50] sm:$0xf]
    %v51 = vld [vmem:[%s3 + $0x54] sm:$0xf]
    %v52 = vld [vmem:[%s3 + $0x58] sm:$0xf]
    %v53 = vld [vmem:[%s3 + $0x5c] sm:$0xf]
    %v54 = vld [vmem:[%s3 + $0x60] sm:$0xf]
    %v55 = vld [vmem:[%s3 + $0x64] sm:$0xf]
    %v56 = vld [vmem:[%s3 + $0x68] sm:$0xf]
    %v57 = vld [vmem:[%s3 + $0x6c] sm:$0xf]
    %v58 = vld [vmem:[%s3 + $0x70] sm:$0xf]
    %v59 = vld [vmem:[%s3 + $0x74] sm:$0xf]
    %v60 = vld [vmem:[%s3 + $0x78] sm:$0xf]
    %v61 = vld [vmem:[%s3 + $0x7c] sm:$0xf]
    %v62 = vld [vmem:[%s3 + $0x80] sm:$0xf]
    %v63 = vld [vmem:[%s3 + $0x84] sm:$0xf]
    %v64 = vld [vmem:[%s3 + $0x88] sm:$0xf]
    %v65 = vld [vmem:[%s3 + $0x8c] sm:$0xf]
    %v66 = vld [vmem:[%s3 + $0x90] sm:$0xf]
    %v67 = vld [vmem:[%s3 + $0x94] sm:$0xf]
    %v68 = vld [vmem:[%s3 + $0x98] sm:$0xf]
    %v69 = vld [vmem:[%s3 + $0x9c] sm:$0xf]
    %v70 = vld [vmem:[%s3 + $0xa0] sm:$0xf]
    %v71 = vld [vmem:[%s3 + $0xa4] sm:$0xf]
    %v72 = vld [vmem:[%s3 + $0xa8] sm:$0xf]
    %v73 = vld [vmem:[%s3 + $0xac] sm:$0xf]
    %v74 = vld [vmem:[%s3 + $0xb0] sm:$0xf]
    %v75 = vld [vmem:[%s3 + $0xb4] sm:$0xf]
    %v76 = vld [vmem:[%s3 + $0xb8] sm:$0xf]
    %v77 = vld [vmem:[%s3 + $0xbc] sm:$0xf]
    %v78 = vld [vmem:[%s3 + $0xc0] sm:$0xf]
    %v79 = vld [vmem:[%s3 + $0xc4] sm:$0xf]
    %v80 = vld [vmem:[%s3 + $0xc8] sm:$0xf]
    %v81 = vld [vmem:[%s3 + $0xcc] sm:$0xf]
    %v82 = vld [vmem:[%s3 + $0xd0] sm:$0xf]
    %v83 = vld [vmem:[%s3 + $0xd4] sm:$0xf]
    %v84 = vld [vmem:[%s3 + $0xd8] sm:$0xf]
    %v85 = vld [vmem:[%s3 + $0xdc] sm:$0xf]
    %v86 = vld [vmem:[%s3 + $0xe0] sm:$0xf]
    %v87 = vld [vmem:[%s3 + $0xe4] sm:$0xf]
    %v88 = vld [vmem:[%s3 + $0xe8] sm:$0xf]
    %v89 = vld [vmem:[%s3 + $0xec] sm:$0xf]
    %v90 = vld [vmem:[%s3 + $0xf0] sm:$0xf]
    %v91 = vld [vmem:[%s3 + $0xf4] sm:$0xf]
    %v92 = vld [vmem:[%s3 + $0xf8] sm:$0xf]
    %v93 = vld [vmem:[%s3 + $0xfc] sm:$0xf]
    %v94 = vld [vmem:[%s3 + $0x100] sm:$0xf]
    %v95 = vld [vmem:[%s3 + $0x104] sm:$0xf]
    %v96 = vld [vmem:[%s3 + $0x108] sm:$0xf]
    %v97 = vld [vmem:[%s3 + $0x10c] sm:$0xf]
    %v98 = vld [vmem:[%s3 + $0x110] sm:$0xf]
    %v99 = vld [vmem:[%s3 + $0x114] sm:$0xf]
    %v100 = vld [vmem:[%s3 + $0x118] sm:$0xf]
    %v101 = vld [vmem:[%s3 + $0x11c] sm:$0xf]
    %v102 = vld [vmem:[%s3 + $0x120] sm:$0xf]
    %v103 = vld [vmem:[%s3 + $0x124] sm:$0xf]
    %v104 = vld [vmem:[%s3 + $0x128] sm:$0xf]
    %v105 = vld [vmem:[%s3 + $0x12c] sm:$0xf]
    %v106 = vld [vmem:[%s3 + $0x130] sm:$0xf]
    %v107 = vld [vmem:[%s3 + $0x134] sm:$0xf]
    %v108 = vld [vmem:[%s3 + $0x138] sm:$0xf]
    %v109 = vld [vmem:[%s3 + $0x13c] sm:$0xf]
    %v110 = vld [vmem:[%s3 + $0x140] sm:$0xf]
    %v111 = vld [vmem:[%s3 + $0x144] sm:$0xf]
    %v112 = vld [vmem:[%s3 + $0x148] sm:$0xf]
    %v113 = vld [vmem:[%s3 + $0x14c] sm:$0xf]
    %v114 = vld [vmem:[%s3 + $0x150] sm:$0xf]
    %v115 = vld [vmem:[%s3 + $0x154] sm:$0xf]
    %v116 = vld [vmem:[%s3 + $0x158] sm:$0xf]
    %v117 = vld [vmem:[%s3 + $0x15c] sm:$0xf]
    %v118 = vld [vmem:[%s3 + $0x160] sm:$0xf]
    %v119 = vld [vmem:[%s3 + $0x164] sm:$0xf]
    %v120 = vld [vmem:[%s3 + $0x168] sm:$0xf]
    %v121 = vld [vmem:[%s3 + $0x16c] sm:$0xf]
    %v122 = vld [vmem:[%s3 + $0x170] sm:$0xf]
    %v123 = vld [vmem:[%s3 + $0x174] sm:$0xf]
    %v124 = vld [vmem:[%s3 + $0x178] sm:$0xf]
    %v125 = vld [vmem:[%s3 + $0x17c] sm:$0xf]
    %v126 = vld [vmem:[%s3 + $0x180] sm:$0xf]
    %v127 = vld [vmem:[%s3 + $0x184] sm:$0xf]
    %v128 = vld [vmem:[%s3 + $0x188] sm:$0xf]
    %v129 = vld [vmem:[%s3 + $0x18c] sm:$0xf]
    %v130 = vld [vmem:[%s3 + $0x190] sm:$0xf]
    %v131 = vld [vmem:[%s3 + $0x194] sm:$0xf]
    %v132 = vld [vmem:[%s3 + $0x198] sm:$0xf]
    %v133 = vld [vmem:[%s3 + $0x19c] sm:$0xf]
    %v134 = vld [vmem:[%s3 + $0x1a0] sm:$0xf]
    %v135 = vld [vmem:[%s3 + $0x1a4] sm:$0xf]
    %v136 = vld [vmem:[%s3 + $0x1a8] sm:$0xf]
    %v137 = vld [vmem:[%s3 + $0x1ac] sm:$0xf]
    %v138 = vld [vmem:[%s3 + $0x1b0] sm:$0xf]
    %v139 = vld [vmem:[%s3 + $0x1b4] sm:$0xf]
    %v140 = vld [vmem:[%s3 + $0x1b8] sm:$0xf]
    %v141 = vld [vmem:[%s3 + $0x1bc] sm:$0xf]
    %v142 = vld [vmem:[%s3 + $0x1c0] sm:$0xf]
    %v143 = vld [vmem:[%s3 + $0x1c4] sm:$0xf]
    %v144 = vld [vmem:[%s3 + $0x1c8] sm:$0xf]
    %v145 = vld [vmem:[%s3 + $0x1cc] sm:$0xf]
    %v146 = vld [vmem:[%s3 + $0x1d0] sm:$0xf]
    %v147 = vld [vmem:[%s3 + $0x1d4] sm:$0xf]
    %v148 = vld [vmem:[%s3 + $0x1d8] sm:$0xf]
    %v149 = vld [vmem:[%s3 + $0x1dc] sm:$0xf]
    %v150 = vld [vmem:[%s3 + $0x1e0] sm:$0xf]
    %v151 = vld [vmem:[%s3 + $0x1e4] sm:$0xf]
    %v152 = vld [vmem:[%s3 + $0x1e8] sm:$0xf]
    %v153 = vld [vmem:[%s3 + $0x1ec] sm:$0xf]
    %v154 = vld [vmem:[%s3 + $0x1f0] sm:$0xf]
    %v155 = vld [vmem:[%s3 + $0x1f4] sm:$0xf]
    %v156 = vld [vmem:[%s3 + $0x1f8] sm:$0xf]
    %v157 = vld [vmem:[%s3 + $0x1fc] sm:$0xf]
    %159 = vst [vmem:[#allocation1] ss:$9 sm:$0xff] %v29
    %v160 = vld [vmem:[#allocation1] sm:$0xff]
    %v161 = vld [vmem:[#allocation1 + $0x9] sm:$0xff]
    %v162 = vld [vmem:[#allocation1 + $0x12] sm:$0xff]
    %v163 = vld [vmem:[#allocation1 + $0x1b] sm:$0xff]
    %v164 = vld [vmem:[#allocation1 + $0x24] sm:$0xff]
    %v165 = vld [vmem:[#allocation1 + $0x2d] sm:$0xff]
    %v166 = vld [vmem:[#allocation1 + $0x36] sm:$0xff]
    %v167 = vld [vmem:[#allocation1 + $0x3f] sm:$0xff]
    %v304 = vunpack.c.l.b16 %v30
    %v305 = vunpack.c.l.b16 %v31
    %v306 = vunpack.c.l.b16 %v32
    %v307 = vunpack.c.l.b16 %v33
    %v308 = vunpack.c.l.b16 %v34
    %v309 = vunpack.c.l.b16 %v35
    %v310 = vunpack.c.l.b16 %v36
    %v311 = vunpack.c.l.b16 %v37
    %v312 = vunpack.c.l.b16 %v38
    %v313 = vunpack.c.l.b16 %v39
    %v314 = vunpack.c.l.b16 %v40
    %v315 = vunpack.c.l.b16 %v41
    %v316 = vunpack.c.l.b16 %v42
    %v317 = vunpack.c.l.b16 %v43
    %v318 = vunpack.c.l.b16 %v44
    %v319 = vunpack.c.l.b16 %v45
    %v320 = vunpack.c.l.b16 %v46
    %v321 = vunpack.c.l.b16 %v47
    %v322 = vunpack.c.l.b16 %v48
    %v323 = vunpack.c.l.b16 %v49
    %v324 = vunpack.c.l.b16 %v50
    %v325 = vunpack.c.l.b16 %v51
    %v326 = vunpack.c.l.b16 %v52
    %v327 = vunpack.c.l.b16 %v53
    %v328 = vunpack.c.l.b16 %v54
    %v329 = vunpack.c.l.b16 %v55
    %v330 = vunpack.c.l.b16 %v56
    %v331 = vunpack.c.l.b16 %v57
    %v332 = vunpack.c.l.b16 %v58
    %v333 = vunpack.c.l.b16 %v59
    %v334 = vunpack.c.l.b16 %v60
    %v335 = vunpack.c.l.b16 %v61
    %v336 = vunpack.c.l.b16 %v62
    %v337 = vunpack.c.l.b16 %v63
    %v338 = vunpack.c.l.b16 %v64
    %v339 = vunpack.c.l.b16 %v65
    %v340 = vunpack.c.l.b16 %v66
    %v341 = vunpack.c.l.b16 %v67
    %v342 = vunpack.c.l.b16 %v68
    %v343 = vunpack.c.l.b16 %v69
    %v344 = vunpack.c.l.b16 %v70
    %v345 = vunpack.c.l.b16 %v71
    %v346 = vunpack.c.l.b16 %v72
    %v347 = vunpack.c.l.b16 %v73
    %v348 = vunpack.c.l.b16 %v74
    %v349 = vunpack.c.l.b16 %v75
    %v350 = vunpack.c.l.b16 %v76
    %v351 = vunpack.c.l.b16 %v77
    %v352 = vunpack.c.l.b16 %v78
    %v353 = vunpack.c.l.b16 %v79
    %v354 = vunpack.c.l.b16 %v80
    %v355 = vunpack.c.l.b16 %v81
    %v356 = vunpack.c.l.b16 %v82
    %v357 = vunpack.c.l.b16 %v83
    %v358 = vunpack.c.l.b16 %v84
    %v359 = vunpack.c.l.b16 %v85
    %v360 = vunpack.c.l.b16 %v86
    %v361 = vunpack.c.l.b16 %v87
    %v362 = vunpack.c.l.b16 %v88
    %v363 = vunpack.c.l.b16 %v89
    %v364 = vunpack.c.l.b16 %v90
    %v365 = vunpack.c.l.b16 %v91
    %v366 = vunpack.c.l.b16 %v92
    %v367 = vunpack.c.l.b16 %v93
    %v368 = vunpack.c.l.b16 %v94
    %v369 = vunpack.c.l.b16 %v95
    %v370 = vunpack.c.l.b16 %v96
    %v371 = vunpack.c.l.b16 %v97
    %v372 = vunpack.c.l.b16 %v98
    %v373 = vunpack.c.l.b16 %v99
    %v374 = vunpack.c.l.b16 %v100
    %v375 = vunpack.c.l.b16 %v101
    %v376 = vunpack.c.l.b16 %v102
    %v377 = vunpack.c.l.b16 %v103
    %v378 = vunpack.c.l.b16 %v104
    %v379 = vunpack.c.l.b16 %v105
    %v380 = vunpack.c.l.b16 %v106
    %v381 = vunpack.c.l.b16 %v107
    %v382 = vunpack.c.l.b16 %v108
    %v383 = vunpack.c.l.b16 %v109
    %v384 = vunpack.c.l.b16 %v110
    %v385 = vunpack.c.l.b16 %v111
    %v386 = vunpack.c.l.b16 %v112
    %v387 = vunpack.c.l.b16 %v113
    %v388 = vunpack.c.l.b16 %v114
    %v389 = vunpack.c.l.b16 %v115
    %v390 = vunpack.c.l.b16 %v116
    %v391 = vunpack.c.l.b16 %v117
    %v392 = vunpack.c.l.b16 %v118
    %v393 = vunpack.c.l.b16 %v119
    %v394 = vunpack.c.l.b16 %v120
    %v395 = vunpack.c.l.b16 %v121
    %v396 = vunpack.c.l.b16 %v122
    %v397 = vunpack.c.l.b16 %v123
    %v398 = vunpack.c.l.b16 %v124
    %v399 = vunpack.c.l.b16 %v125
    %v400 = vunpack.c.l.b16 %v126
    %v401 = vunpack.c.l.b16 %v127
    %v402 = vunpack.c.l.b16 %v128
    %v403 = vunpack.c.l.b16 %v129
    %v404 = vunpack.c.l.b16 %v130
    %v405 = vunpack.c.l.b16 %v131
    %v406 = vunpack.c.l.b16 %v132
    %v407 = vunpack.c.l.b16 %v133
    %v408 = vunpack.c.l.b16 %v134
    %v409 = vunpack.c.l.b16 %v135
    %v410 = vunpack.c.l.b16 %v136
    %v411 = vunpack.c.l.b16 %v137
    %v412 = vunpack.c.l.b16 %v138
    %v413 = vunpack.c.l.b16 %v139
    %v414 = vunpack.c.l.b16 %v140
    %v415 = vunpack.c.l.b16 %v141
    %v416 = vunpack.c.l.b16 %v142
    %v417 = vunpack.c.l.b16 %v143
    %v418 = vunpack.c.l.b16 %v144
    %v419 = vunpack.c.l.b16 %v145
    %v420 = vunpack.c.l.b16 %v146
    %v421 = vunpack.c.l.b16 %v147
    %v422 = vunpack.c.l.b16 %v148
    %v423 = vunpack.c.l.b16 %v149
    %v424 = vunpack.c.l.b16 %v150
    %v425 = vunpack.c.l.b16 %v151
    %v426 = vunpack.c.l.b16 %v152
    %v427 = vunpack.c.l.b16 %v153
    %v428 = vunpack.c.l.b16 %v154
    %v429 = vunpack.c.l.b16 %v155
    %v430 = vunpack.c.l.b16 %v156
    %v431 = vunpack.c.l.b16 %v157
    %v432 = vpack.c.b16 %v305, %v304
    %v433 = vpack.c.b16 %v307, %v306
    %v434 = vpack.c.b16 %v309, %v308
    %v435 = vpack.c.b16 %v311, %v310
    %v436 = vpack.c.b16 %v313, %v312
    %v437 = vpack.c.b16 %v315, %v314
    %v438 = vpack.c.b16 %v317, %v316
    %v439 = vpack.c.b16 %v319, %v318
    %v440 = vpack.c.b16 %v321, %v320
    %v441 = vpack.c.b16 %v323, %v322
    %v442 = vpack.c.b16 %v325, %v324
    %v443 = vpack.c.b16 %v327, %v326
    %v444 = vpack.c.b16 %v329, %v328
    %v445 = vpack.c.b16 %v331, %v330
    %v446 = vpack.c.b16 %v333, %v332
    %v447 = vpack.c.b16 %v335, %v334
    %v448 = vpack.c.b16 %v337, %v336
    %v449 = vpack.c.b16 %v339, %v338
    %v450 = vpack.c.b16 %v341, %v340
    %v451 = vpack.c.b16 %v343, %v342
    %v452 = vpack.c.b16 %v345, %v344
    %v453 = vpack.c.b16 %v347, %v346
    %v454 = vpack.c.b16 %v349, %v348
    %v455 = vpack.c.b16 %v351, %v350
    %v456 = vpack.c.b16 %v353, %v352
    %v457 = vpack.c.b16 %v355, %v354
    %v458 = vpack.c.b16 %v357, %v356
    %v459 = vpack.c.b16 %v359, %v358
    %v460 = vpack.c.b16 %v361, %v360
    %v461 = vpack.c.b16 %v363, %v362
    %v462 = vpack.c.b16 %v365, %v364
    %v463 = vpack.c.b16 %v367, %v366
    %v464 = vpack.c.b16 %v369, %v368
    %v465 = vpack.c.b16 %v371, %v370
    %v466 = vpack.c.b16 %v373, %v372
    %v467 = vpack.c.b16 %v375, %v374
    %v468 = vpack.c.b16 %v377, %v376
    %v469 = vpack.c.b16 %v379, %v378
    %v470 = vpack.c.b16 %v381, %v380
    %v471 = vpack.c.b16 %v383, %v382
    %v472 = vpack.c.b16 %v385, %v384
    %v473 = vpack.c.b16 %v387, %v386
    %v474 = vpack.c.b16 %v389, %v388
    %v475 = vpack.c.b16 %v391, %v390
    %v476 = vpack.c.b16 %v393, %v392
    %v477 = vpack.c.b16 %v395, %v394
    %v478 = vpack.c.b16 %v397, %v396
    %v479 = vpack.c.b16 %v399, %v398
    %v480 = vpack.c.b16 %v401, %v400
    %v481 = vpack.c.b16 %v403, %v402
    %v482 = vpack.c.b16 %v405, %v404
    %v483 = vpack.c.b16 %v407, %v406
    %v484 = vpack.c.b16 %v409, %v408
    %v485 = vpack.c.b16 %v411, %v410
    %v486 = vpack.c.b16 %v413, %v412
    %v487 = vpack.c.b16 %v415, %v414
    %v488 = vpack.c.b16 %v417, %v416
    %v489 = vpack.c.b16 %v419, %v418
    %v490 = vpack.c.b16 %v421, %v420
    %v491 = vpack.c.b16 %v423, %v422
    %v492 = vpack.c.b16 %v425, %v424
    %v493 = vpack.c.b16 %v427, %v426
    %v494 = vpack.c.b16 %v429, %v428
    %v495 = vpack.c.b16 %v431, %v430
    %560 = vmatpush.bf16.msra.mxu0 %v439
    %561 = vmatpush.bf16.msra.mxu0 %v438
    %562 = vmatpush.bf16.msra.mxu0 %v437
    %563 = vmatpush.bf16.msra.mxu0 %v436
    %564 = vmatpush.bf16.msra.mxu0 %v435
    %565 = vmatpush.bf16.msra.mxu0 %v434
    %566 = vmatpush.bf16.msra.mxu0 %v433
    %567 = vmatpush.bf16.msra.mxu0 %v432
    %568 = vmatmul.bf16.gmra.mxu0 %v160
    %v569 = vpop.f32.mrf.mxu0
    %v570 = vadd.f32 0.0, %v569
    %v571 = vpop.f32.mrf.mxu0
    %572 = vdwg.mxu0
    %573 = vmatpush.bf16.msra.mxu0 %v447
    %574 = vmatpush.bf16.msra.mxu0 %v446
    %575 = vmatpush.bf16.msra.mxu0 %v445
    %576 = vmatpush.bf16.msra.mxu0 %v444
    %577 = vmatpush.bf16.msra.mxu0 %v443
    %578 = vmatpush.bf16.msra.mxu0 %v442
    %579 = vmatpush.bf16.msra.mxu0 %v441
    %580 = vmatpush.bf16.msra.mxu0 %v440
    %581 = vmatmul.bf16.gmra.mxu0 %v161
    %v582 = vpop.f32.mrf.mxu0
    %v583 = vadd.f32 %v570, %v582
    %v584 = vpop.f32.mrf.mxu0
    %585 = vdwg.mxu0
    %586 = vmatpush.bf16.msra.mxu0 %v455
    %587 = vmatpush.bf16.msra.mxu0 %v454
    %588 = vmatpush.bf16.msra.mxu0 %v453
    %589 = vmatpush.bf16.msra.mxu0 %v452
    %590 = vmatpush.bf16.msra.mxu0 %v451
    %591 = vmatpush.bf16.msra.mxu0 %v450
    %592 = vmatpush.bf16.msra.mxu0 %v449
    %593 = vmatpush.bf16.msra.mxu0 %v448
    %594 = vmatmul.bf16.gmra.mxu0 %v162
    %v595 = vpop.f32.mrf.mxu0
    %v596 = vadd.f32 %v583, %v595
    %v597 = vpop.f32.mrf.mxu0
    %598 = vdwg.mxu0
    %599 = vmatpush.bf16.msra.mxu0 %v463
    %600 = vmatpush.bf16.msra.mxu0 %v462
    %601 = vmatpush.bf16.msra.mxu0 %v461
    %602 = vmatpush.bf16.msra.mxu0 %v460
    %603 = vmatpush.bf16.msra.mxu0 %v459
    %604 = vmatpush.bf16.msra.mxu0 %v458
    %605 = vmatpush.bf16.msra.mxu0 %v457
    %606 = vmatpush.bf16.msra.mxu0 %v456
    %607 = vmatmul.bf16.gmra.mxu0 %v163
    %v608 = vpop.f32.mrf.mxu0
    %v609 = vadd.f32 %v596, %v608
    %v610 = vpop.f32.mrf.mxu0
    %611 = vdwg.mxu0
    %612 = vmatpush.bf16.msra.mxu0 %v471
    %613 = vmatpush.bf16.msra.mxu0 %v470
    %614 = vmatpush.bf16.msra.mxu0 %v469
    %615 = vmatpush.bf16.msra.mxu0 %v468
    %616 = vmatpush.bf16.msra.mxu0 %v467
    %617 = vmatpush.bf16.msra.mxu0 %v466
    %618 = vmatpush.bf16.msra.mxu0 %v465
    %619 = vmatpush.bf16.msra.mxu0 %v464
    %620 = vmatmul.bf16.gmra.mxu0 %v164
    %v621 = vpop.f32.mrf.mxu0
    %v622 = vadd.f32 %v609, %v621
    %v623 = vpop.f32.mrf.mxu0
    %624 = vdwg.mxu0
    %625 = vmatpush.bf16.msra.mxu0 %v479
    %626 = vmatpush.bf16.msra.mxu0 %v478
    %627 = vmatpush.bf16.msra.mxu0 %v477
    %628 = vmatpush.bf16.msra.mxu0 %v476
    %629 = vmatpush.bf16.msra.mxu0 %v475
    %630 = vmatpush.bf16.msra.mxu0 %v474
    %631 = vmatpush.bf16.msra.mxu0 %v473
    %632 = vmatpush.bf16.msra.mxu0 %v472
    %633 = vmatmul.bf16.gmra.mxu0 %v165
    %v634 = vpop.f32.mrf.mxu0
    %v635 = vadd.f32 %v622, %v634
    %v636 = vpop.f32.mrf.mxu0
    %637 = vdwg.mxu0
    %638 = vmatpush.bf16.msra.mxu0 %v487
    %639 = vmatpush.bf16.msra.mxu0 %v486
    %640 = vmatpush.bf16.msra.mxu0 %v485
    %641 = vmatpush.bf16.msra.mxu0 %v484
    %642 = vmatpush.bf16.msra.mxu0 %v483
    %643 = vmatpush.bf16.msra.mxu0 %v482
    %644 = vmatpush.bf16.msra.mxu0 %v481
    %645 = vmatpush.bf16.msra.mxu0 %v480
    %646 = vmatmul.bf16.gmra.mxu0 %v166
    %v647 = vpop.f32.mrf.mxu0
    %v648 = vadd.f32 %v635, %v647
    %v649 = vpop.f32.mrf.mxu0
    %650 = vdwg.mxu0
    %651 = vmatpush.bf16.msra.mxu0 %v495
    %652 = vmatpush.bf16.msra.mxu0 %v494
    %653 = vmatpush.bf16.msra.mxu0 %v493
    %654 = vmatpush.bf16.msra.mxu0 %v492
    %655 = vmatpush.bf16.msra.mxu0 %v491
    %656 = vmatpush.bf16.msra.mxu0 %v490
    %657 = vmatpush.bf16.msra.mxu0 %v489
    %658 = vmatpush.bf16.msra.mxu0 %v488
    %659 = vmatmul.bf16.gmra.mxu0 %v167
    %v660 = vpop.f32.mrf.mxu0
    %v661 = vadd.f32 %v648, %v660
    %v662 = vpop.f32.mrf.mxu0
    %663 = vdwg.mxu0
    %s664 = sld [smem:[#allocation3]]
    %s665 = scalar_lea.vmem %s4, %s664
    %v666 = vld [vmem:[%s665] sm:$0x1]
    %s667 = sld [smem:[#allocation3 + $0x1]]
    %s668 = scalar_lea.vmem %s4, %s667
    %v669 = vld [vmem:[%s668] sm:$0x1]
    %v670 = vadd.f32 %v666, %v669
    %s671 = sld [smem:[#allocation3 + $0x2]]
    %s672 = scalar_lea.vmem %s4, %s671
    %v673 = vld [vmem:[%s672] sm:$0x1]
    %v674 = vadd.f32 %v670, %v673
    %s675 = sld [smem:[#allocation3 + $0x3]]
    %s676 = scalar_lea.vmem %s4, %s675
    %v677 = vld [vmem:[%s676] sm:$0x1]
    %v678 = vadd.f32 %v674, %v677
    %s679 = sld [smem:[#allocation3 + $0x4]]
    %s680 = scalar_lea.vmem %s4, %s679
    %v681 = vld [vmem:[%s680] sm:$0x1]
    %v682 = vadd.f32 %v678, %v681
    %s683 = sld [smem:[#allocation3 + $0x5]]
    %s684 = scalar_lea.vmem %s4, %s683
    %v685 = vld [vmem:[%s684] sm:$0x1]
    %v686 = vadd.f32 %v682, %v685
    %s687 = sld [smem:[#allocation3 + $0x6]]
    %s688 = scalar_lea.vmem %s4, %s687
    %v689 = vld [vmem:[%s688] sm:$0x1]
    %v690 = vadd.f32 %v686, %v689
    %s691 = sld [smem:[#allocation3 + $0x7]]
    %s692 = scalar_lea.vmem %s4, %s691
    %v693 = vld [vmem:[%s692] sm:$0x1]
    %v694 = vadd.f32 %v690, %v693
    %s695 = sld [smem:[#allocation3 + $0x80]]
    %s696 = scalar_lea.vmem %s4, %s695
    %v697 = vld [vmem:[%s696] sm:$0x1]
    %s698 = sld [smem:[#allocation3 + $0x81]]
    %s699 = scalar_lea.vmem %s4, %s698
    %v700 = vld [vmem:[%s699] sm:$0x1]
    %v701 = vadd.f32 %v697, %v700
    %s702 = sld [smem:[#allocation3 + $0x82]]
    %s703 = scalar_lea.vmem %s4, %s702
    %v704 = vld [vmem:[%s703] sm:$0x1]
    %v705 = vadd.f32 %v701, %v704
    %s706 = sld [smem:[#allocation3 + $0x83]]
    %s707 = scalar_lea.vmem %s4, %s706
    %v708 = vld [vmem:[%s707] sm:$0x1]
    %v709 = vadd.f32 %v705, %v708
    %s710 = sld [smem:[#allocation3 + $0x84]]
    %s711 = scalar_lea.vmem %s4, %s710
    %v712 = vld [vmem:[%s711] sm:$0x1]
    %v713 = vadd.f32 %v709, %v712
    %s714 = sld [smem:[#allocation3 + $0x85]]
    %s715 = scalar_lea.vmem %s4, %s714
    %v716 = vld [vmem:[%s715] sm:$0x1]
    %v717 = vadd.f32 %v713, %v716
    %s718 = sld [smem:[#allocation3 + $0x86]]
    %s719 = scalar_lea.vmem %s4, %s718
    %v720 = vld [vmem:[%s719] sm:$0x1]
    %v721 = vadd.f32 %v717, %v720
    %s722 = sld [smem:[#allocation3 + $0x87]]
    %s723 = scalar_lea.vmem %s4, %s722
    %v724 = vld [vmem:[%s723] sm:$0x1]
    %v725 = vadd.f32 %v721, %v724
    %v727 = vrot.slane %v725, 7
    %vm729 = vcmask 1040384
    %v730 = vsel %vm729, %v694, %v727
    %v731 = vld [vmem:[%s5] sm:$0xff]
    %v732 = vld [vmem:[%s5 + $0x8] sm:$0xff]
    %v733 = vld [vmem:[%s5 + $0x10] sm:$0xff]
    %v734 = vld [vmem:[%s5 + $0x18] sm:$0xff]
    %vm735 = vcmask 261120
    %v737 = vsel %vm735, %v730, 0
    %739 = vmatpush.msra.mxu0 0.0
    %740 = vmatpush.msra.mxu0 0.0
    %741 = vmatpush.msra.mxu0 0.0
    %742 = vmatpush.msra.mxu0 0.0
    %743 = vmatpush.msra.mxu0 0.0
    %744 = vmatpush.msra.mxu0 0.0
    %745 = vmatpush.msra.mxu0 0.0
    %746 = vmatpush.msra.mxu0 0.0
    %747 = vmatpush.msra.mxu0 0.0
    %748 = vmatpush.msra.mxu0 0.0
    %749 = vmatpush.msra.mxu0 0.0
    %750 = vmatpush.msra.mxu0 0.0
    %751 = vmatpush.msra.mxu0 %v734
    %752 = vmatpush.msra.mxu0 %v733
    %753 = vmatpush.msra.mxu0 %v732
    %754 = vmatpush.msra.mxu0 %v731
    %755 = vmatmul.f32.gmra.mxu0 %v737
    %v756 = vpop.f32.mrf.mxu0
    %v757 = vadd.f32 0.0, %v756
    %758 = vdwg.mxu0
    %v759 = vmul.f32 %v661, %v661
    %vm760 = vcmask 254976
    %v761 = vsel %vm760, %v759, 0.0
    %762 = vadd.xlane.f32.xlu0 %v761
    %v763 = vpop.xlane.xlu0 %762
    %v764 = vadd.f32 %v763, 1e-12
    %v765 = vrsqrt.pop %v764
    %v766 = vmul.f32 %v765, %v764
    %v767 = vmul.f32 %v766, %v765
    %v768 = vmul.f32 0.5, %v767
    %v769 = vsub.f32 1.5, %v768
    %v770 = vmul.f32 %v765, %v769
    %vm771 = vweird.f32 %v764
    %vm772 = vweird.f32 %v765
    %vm773 = vmor %vm771, %vm772
    %v774 = vsel %vm773, %v765, %v770
    %v775 = vmul.f32 %v757, %v757
    %v776 = vsel %vm760, %v775, 0.0
    %777 = vadd.xlane.f32.xlu0 %v776
    %v778 = vpop.xlane.xlu0 %777
    %v779 = vadd.f32 %v778, 1e-12
    %v780 = vrsqrt.pop %v779
    %v781 = vmul.f32 %v780, %v779
    %v782 = vmul.f32 %v781, %v780
    %v783 = vmul.f32 0.5, %v782
    %v784 = vsub.f32 1.5, %v783
    %v785 = vmul.f32 %v780, %v784
    %vm786 = vweird.f32 %v779
    %vm787 = vweird.f32 %v780
    %vm788 = vmor %vm786, %vm787
    %v789 = vsel %vm788, %v780, %v785
    %s790 = sld [smem:[#allocation4]]
    %v791 = vstv %s790
    %v792 = vmul.f32 %v774, %v791
    %v793 = vmul.f32 %v661, %v792
    %v794 = vmul.f32 %v757, %v789
    %v796 = vsel %vm735, %v793, 0
    %v799 = vsel %vm735, %v794, 0
    %801 = vmatpush.xpose.msra.mxu0 0.0
    %802 = vmatpush.xpose.msra.mxu0 0.0
    %803 = vmatpush.xpose.msra.mxu0 0.0
    %804 = vmatpush.xpose.msra.mxu0 0.0
    %805 = vmatpush.xpose.msra.mxu0 0.0
    %806 = vmatpush.xpose.msra.mxu0 0.0
    %807 = vmatpush.xpose.msra.mxu0 0.0
    %808 = vmatpush.xpose.msra.mxu0 0.0
    %809 = vmatpush.xpose.msra.mxu0 0.0
    %810 = vmatpush.xpose.msra.mxu0 0.0
    %811 = vmatpush.xpose.msra.mxu0 0.0
    %812 = vmatpush.xpose.msra.mxu0 0.0
    %813 = vmatpush.xpose.msra.mxu0 0.0
    %814 = vmatpush.xpose.msra.mxu0 0.0
    %815 = vmatpush.xpose.msra.mxu0 0.0
    %816 = vmatpush.xpose.msra.mxu0 %v799
    %817 = vmatmul.f32.gmra.mxu0 %v796
    %v818 = vpop.f32.mrf.mxu0
    %v819 = vadd.f32 0.0, %v818
    %820 = vdwg.mxu0
    %vm821 = vcmask 9216
    %822 = vst.msk [vmem:[#allocation5] sm:$0x3] %vm821, %v819
    // Predicated region
    $region18: #{tpu_custom_call.1} parent=1 // pred_check
      _
    $region19: #{tpu_custom_call.1} parent=1 // pred_check_branch
      %824 = sbr.rel (0) target = $region21
    $region20: #{tpu_custom_call.1} parent=1 // pred_region
      %826 = vsyncadd [#allocation6], 0
      %s828 = sshll.u32 [#allocation5], 4
      %s829 = int_to_ptr.vmem [resolvable:$true] %s828
      %s830 = sshll.u32 %s6, 4
      %s831 = int_to_ptr.hbm [resolvable:$true] %s830
      %833 = dma.vmem_to_hbm [thread:$0]  %s829, 32, %s831, [#allocation6]
    $region21: #{tpu_custom_call.1} parent=1 // pred_fallthru
      _
    // Predicated region
    $region22: #{tpu_custom_call.1} parent=1 // pred_check
      _
    $region23: #{tpu_custom_call.1} parent=1 // pred_check_branch
      %835 = sbr.rel (0) target = $region25
    $region24: #{tpu_custom_call.1} parent=1 // pred_region
      %837 = dma.done [#allocation6], 32
    $region25: #{tpu_custom_call.1} parent=1 // pred_fallthru
      _
    %838 = vsyncpa [#allocation6], 1

</llo_original>
